<compile_context>
chip_gen: v6e
topology: v6e:2x2x1
jax: 0.10.0
libtpu: 0.0.40
codegen_flags: <defaults>
</compile_context>

<pallas_src>
import functools

import jax
import jax.numpy as jnp
from jax.experimental import pallas as pl
from jax.experimental.pallas import tpu as pltpu


def _round_up(x, m):
    return -(-x // m) * m


def _single_tensorcore_device():
    """True for known single-TensorCore chips (v5e / v6e); False otherwise."""
    try:
        kind = jax.devices()[0].device_kind.lower()
    except Exception:
        return False
    return any(t in kind for t in ("v5e", "v5 lite", "v5litepod",
                                   "v6e", "v6 lite"))


def _inception_im2col_kernel(x_ref, w_ref, o_ref, col_ref, *,
                             BN, Wp, Cin_p, K, HWpp):
    """Fused inception conv for a block of BN batch elements per grid step.

    x_ref   : (BN, Cin_p, L)           flattened, zero-padded input (VMEM)
    w_ref   : (Cout, K*K*Cin_p + 1)    fused weight; last column = bias
    o_ref   : (BN, Cout, HWpp)         lane-dense output block (HWpp % 128 == 0)
    col_ref : (K*K*Cin_p + 1, BN*HWpp) im2col scratch; last row = ones (bias)
    """
    KKC = K * K * Cin_p

    # Ones row so the bias rides inside the single MXU matmul.
    col_ref[KKC:KKC + 1, :] = jnp.ones((1, BN * HWpp), jnp.float32)

    # im2col: every (kh, kw) tap of the conv window is a *contiguous* slice of
    # the flattened padded input -> K*K plain copies per batch element, each an
    # 8-sublane-aligned, 128-lane-multiple store (no masked/split stores).
    for bn in range(BN):
        c0 = bn * HWpp
        for kh in range(K):
            for kw in range(K):
                s = kh * Wp + kw
                r0 = (kh * K + kw) * Cin_p
                col_ref[r0:r0 + Cin_p, c0:c0 + HWpp] = x_ref[bn, :, s:s + HWpp]

    # Single MXU matmul: (Cout, KKC+1) @ (KKC+1, BN*HWpp) -> (Cout, BN*HWpp).
    acc = jnp.dot(w_ref[...], col_ref[...], preferred_element_type=jnp.float32)

    # Lane-dense stores; the channel axis keeps the branch-concat ordering.
    for bn in range(BN):
        o_ref[bn, :, :] = acc[:, bn * HWpp:(bn + 1) * HWpp].astype(o_ref.dtype)


def inception_block_pallas(x_nchw, w_oihw, bias, *, batch_block=None):
    """x_nchw: (N, Cin, H, W); w_oihw: (Cout, Cin, K, K); bias: (Cout,)."""
    N, Cin, H, W = x_nchw.shape
    Cout, _, K, _ = w_oihw.shape
    pad = (K - 1) // 2
    Hp, Wp = H + 2 * pad, W + 2 * pad
    HWp = H * Wp                          # Wp-strided flat output length
    HWpp = _round_up(HWp, 128)            # lane-dense col / output width
    Cin_p = _round_up(max(Cin, 8), 8)     # f32 sublane-aligned channel count
    KKC = K * K * Cin_p
    KKC1 = KKC + 1                        # + ones row (folded bias)

    # The flat input must cover the largest shifted, lane-dense slice.
    max_shift = (K - 1) * Wp + (K - 1)
    Hp_ext = max(Hp, -(-(max_shift + HWpp) // Wp))
    L = Hp_ext * Wp

    # Batch block: fold the batch on single-TC chips (one wider matmul, no
    # per-step overhead), keep a parallel grid axis on multi-TC chips (v7x).
    if batch_block is None:
        if _single_tensorcore_device():
            bn = min(N, max(1, (8 * 1024 * 1024) // (KKC1 * HWpp * 4)))
        else:
            bn = 1
    else:
        bn = batch_block
    bn = max(1, min(bn, N))
    while N % bn:
        bn -= 1

    # ONE pad: zero channels up to Cin_p, "same" spatial zero-pad, plus extra
    # bottom rows so every shifted lane-dense slice stays in bounds.  The
    # reshape flattening (Hp_ext, Wp) is metadata-only.
    x_flat = jnp.pad(
        x_nchw,
        ((0, 0), (0, Cin_p - Cin), (pad, Hp_ext - H - pad), (pad, pad)),
    ).reshape(N, Cin_p, L)

    # Fused weight with contraction order (kh, kw, cin_p); bias as last column.
    w_perm = jnp.pad(jnp.transpose(w_oihw, (0, 2, 3, 1)),
                     ((0, 0), (0, 0), (0, 0), (0, Cin_p - Cin)))
    w_fused = jnp.concatenate(
        [w_perm.reshape(Cout, KKC), bias.reshape(Cout, 1)], axis=1)

    kernel = functools.partial(_inception_im2col_kernel,
                               BN=bn, Wp=Wp, Cin_p=Cin_p, K=K, HWpp=HWpp)

    flops = 2 * N * Cout * KKC1 * HWpp
    bytes_accessed = 4 * (N * Cin_p * L + Cout * KKC1 + N * Cout * HWpp)

    out_flat = pl.pallas_call(
        kernel,
        out_shape=jax.ShapeDtypeStruct((N, Cout, HWpp), x_nchw.dtype),
        grid_spec=pltpu.PrefetchScalarGridSpec(
            num_scalar_prefetch=0,
            grid=(N // bn,),
            in_specs=[
                pl.BlockSpec((bn, Cin_p, L), lambda g: (g, 0, 0)),
                pl.BlockSpec((Cout, KKC1), lambda g: (0, 0)),
            ],
            out_specs=pl.BlockSpec((bn, Cout, HWpp), lambda g: (g, 0, 0)),
            scratch_shapes=[pltpu.VMEM((KKC1, bn * HWpp), jnp.float32)],
        ),
        compiler_params=pltpu.CompilerParams(
            dimension_semantics=("parallel",),
            vmem_limit_bytes=32 * 1024 * 1024),
        cost_estimate=pl.CostEstimate(flops=flops, transcendentals=0,
                                      bytes_accessed=bytes_accessed),
    )(x_flat, w_fused)

    # Slice off the lane padding, then strip the Wp-stride garbage columns.
    return out_flat[:, :, :HWp].reshape(N, Cout, H, Wp)[:, :, :, :W]


def build_fused_branch_params(key, cin, branch_cfg, K=5):
    """Deterministic per-branch Conv2d params plus the fused (Cout_total, Cin,
    K, K) weight stacking the branches along out-channels (== torch.cat order),
    with smaller kernels zero-embedded at the centre of a KxK window."""
    branch_params, ws, bs = [], [], []
    for i, (cout, k) in enumerate(branch_cfg):
        kw_key, kb_key = jax.random.split(jax.random.fold_in(key, i))
        w = jax.random.normal(kw_key, (cout, cin, k, k), jnp.float32) * 0.1
        b = jax.random.normal(kb_key, (cout,), jnp.float32) * 0.1
        branch_params.append((w, b, k))
        off = (K - k) // 2
        w_full = jnp.zeros((cout, cin, K, K), jnp.float32)
        w_full = w_full.at[:, :, off:off + k, off:off + k].set(w)
        ws.append(w_full)
        bs.append(b)
    w_oihw = jnp.concatenate(ws, axis=0)          # (Cout_total, Cin, K, K)
    bias = jnp.concatenate(bs, axis=0)            # (Cout_total,)
    return branch_params, w_oihw, bias


if __name__ == "__main__":
    key = jax.random.PRNGKey(0)
    N, Cin, H, W = 2, 4, 16, 16
    branch_cfg = [(4, 1), (8, 3), (4, 5)]   # (out_channels, kernel_size)

    xk, pk = jax.random.split(key)
    x = jax.random.normal(xk, (N, Cin, H, W), jnp.float32)
    branch_params, w_oihw, bias = build_fused_branch_params(pk, Cin,
                                                            branch_cfg, K=5)

    out = inception_block_pallas(x, w_oihw, bias)
    out = jax.block_until_ready(out)

    # Reference: the InceptionBlock forward itself -- per-branch "same" convs
    # concatenated along the channel axis.
    refs = []
    for (w_b, b_b, k) in branch_params:
        p = (k - 1) // 2
        r = jax.lax.conv_general_dilated(
            x, w_b, window_strides=(1, 1), padding=[(p, p), (p, p)],
            dimension_numbers=("NCHW", "OIHW", "NCHW"))
        refs.append(r + b_b.reshape(1, -1, 1, 1))
    ref = jnp.concatenate(refs, axis=1)

    assert out.shape == (N, sum(c for c, _ in branch_cfg), H, W)
    assert jnp.allclose(out, ref, atol=1e-4, rtol=1e-4)

    print("KERNEL_OK")
</pallas_src>

<mosaic_0001>
module attributes {stable_mosaic.version = 11 : i64} {
  func.func @_inception_im2col_kernel(%arg0: i32, %arg1: memref<1x8x480xf32, #tpu.memory_space<vmem>>, %arg2: memref<16x201xf32, #tpu.memory_space<vmem>>, %arg3: memref<1x16x384xf32, #tpu.memory_space<vmem>>, %arg4: memref<201x384xf32, #tpu.memory_space<vmem>>) attributes {dimension_semantics = [#tpu.dimension_semantics<parallel>], iteration_bounds = array<i64: 2>, scalar_prefetch = 0 : i64, scratch_operands = 1 : i64, tpu.core_type = #tpu.core_type<tc>, window_params = [{transform_indices = @transform_0, window_bounds = array<i64: 1, 8, 480>}, {pipeline_mode = #tpu.pipeline_mode<synchronous>, transform_indices = @transform_1, window_bounds = array<i64: 16, 201>}, {transform_indices = @transform_2, window_bounds = array<i64: 1, 16, 384>}]} {
    %cst = arith.constant 1.000000e+00 : f32
    %0 = vector.broadcast %cst : f32 to vector<1x384xf32>
    %c200 = arith.constant 200 : index
    %c0 = arith.constant 0 : index
    %1 = vector.load %arg4[%c200, %c0] : memref<201x384xf32, #tpu.memory_space<vmem>>, vector<1x384xf32>
    tpu.vector_store %arg4[%c200, %c0], %0 {strides = array<i32>} : memref<201x384xf32, #tpu.memory_space<vmem>>, vector<1x384xf32>,
    %c0_0 = arith.constant 0 : index
    %c0_1 = arith.constant 0 : index
    %c0_2 = arith.constant 0 : index
    %2 = vector.load %arg1[%c0_0, %c0_1, %c0_2] : memref<1x8x480xf32, #tpu.memory_space<vmem>>, vector<1x8x384xf32>
    %3 = vector.shape_cast %2 : vector<1x8x384xf32> to vector<8x384xf32>
    %c0_3 = arith.constant 0 : index
    %c0_4 = arith.constant 0 : index
    %4 = vector.load %arg4[%c0_3, %c0_4] : memref<201x384xf32, #tpu.memory_space<vmem>>, vector<8x384xf32>
    tpu.vector_store %arg4[%c0_3, %c0_4], %3 {strides = array<i32>} : memref<201x384xf32, #tpu.memory_space<vmem>>, vector<8x384xf32>,
    %c0_5 = arith.constant 0 : index
    %c0_6 = arith.constant 0 : index
    %c1 = arith.constant 1 : index
    %5 = vector.load %arg1[%c0_5, %c0_6, %c1] : memref<1x8x480xf32, #tpu.memory_space<vmem>>, vector<1x8x384xf32>
    %6 = vector.shape_cast %5 : vector<1x8x384xf32> to vector<8x384xf32>
    %c8 = arith.constant 8 : index
    %c0_7 = arith.constant 0 : index
    %7 = vector.load %arg4[%c8, %c0_7] : memref<201x384xf32, #tpu.memory_space<vmem>>, vector<8x384xf32>
    tpu.vector_store %arg4[%c8, %c0_7], %6 {strides = array<i32>} : memref<201x384xf32, #tpu.memory_space<vmem>>, vector<8x384xf32>,
    %c0_8 = arith.constant 0 : index
    %c0_9 = arith.constant 0 : index
    %c2 = arith.constant 2 : index
    %8 = vector.load %arg1[%c0_8, %c0_9, %c2] : memref<1x8x480xf32, #tpu.memory_space<vmem>>, vector<1x8x384xf32>
    %9 = vector.shape_cast %8 : vector<1x8x384xf32> to vector<8x384xf32>
    %c16 = arith.constant 16 : index
    %c0_10 = arith.constant 0 : index
    %10 = vector.load %arg4[%c16, %c0_10] : memref<201x384xf32, #tpu.memory_space<vmem>>, vector<8x384xf32>
    tpu.vector_store %arg4[%c16, %c0_10], %9 {strides = array<i32>} : memref<201x384xf32, #tpu.memory_space<vmem>>, vector<8x384xf32>,
    %c0_11 = arith.constant 0 : index
    %c0_12 = arith.constant 0 : index
    %c3 = arith.constant 3 : index
    %11 = vector.load %arg1[%c0_11, %c0_12, %c3] : memref<1x8x480xf32, #tpu.memory_space<vmem>>, vector<1x8x384xf32>
    %12 = vector.shape_cast %11 : vector<1x8x384xf32> to vector<8x384xf32>
    %c24 = arith.constant 24 : index
    %c0_13 = arith.constant 0 : index
    %13 = vector.load %arg4[%c24, %c0_13] : memref<201x384xf32, #tpu.memory_space<vmem>>, vector<8x384xf32>
    tpu.vector_store %arg4[%c24, %c0_13], %12 {strides = array<i32>} : memref<201x384xf32, #tpu.memory_space<vmem>>, vector<8x384xf32>,
    %c0_14 = arith.constant 0 : index
    %c0_15 = arith.constant 0 : index
    %c4 = arith.constant 4 : index
    %14 = vector.load %arg1[%c0_14, %c0_15, %c4] : memref<1x8x480xf32, #tpu.memory_space<vmem>>, vector<1x8x384xf32>
    %15 = vector.shape_cast %14 : vector<1x8x384xf32> to vector<8x384xf32>
    %c32 = arith.constant 32 : index
    %c0_16 = arith.constant 0 : index
    %16 = vector.load %arg4[%c32, %c0_16] : memref<201x384xf32, #tpu.memory_space<vmem>>, vector<8x384xf32>
    tpu.vector_store %arg4[%c32, %c0_16], %15 {strides = array<i32>} : memref<201x384xf32, #tpu.memory_space<vmem>>, vector<8x384xf32>,
    %c0_17 = arith.constant 0 : index
    %c0_18 = arith.constant 0 : index
    %c20 = arith.constant 20 : index
    %17 = vector.load %arg1[%c0_17, %c0_18, %c20] : memref<1x8x480xf32, #tpu.memory_space<vmem>>, vector<1x8x384xf32>
    %18 = vector.shape_cast %17 : vector<1x8x384xf32> to vector<8x384xf32>
    %c40 = arith.constant 40 : index
    %c0_19 = arith.constant 0 : index
    %19 = vector.load %arg4[%c40, %c0_19] : memref<201x384xf32, #tpu.memory_space<vmem>>, vector<8x384xf32>
    tpu.vector_store %arg4[%c40, %c0_19], %18 {strides = array<i32>} : memref<201x384xf32, #tpu.memory_space<vmem>>, vector<8x384xf32>,
    %c0_20 = arith.constant 0 : index
    %c0_21 = arith.constant 0 : index
    %c21 = arith.constant 21 : index
    %20 = vector.load %arg1[%c0_20, %c0_21, %c21] : memref<1x8x480xf32, #tpu.memory_space<vmem>>, vector<1x8x384xf32>
    %21 = vector.shape_cast %20 : vector<1x8x384xf32> to vector<8x384xf32>
    %c48 = arith.constant 48 : index
    %c0_22 = arith.constant 0 : index
    %22 = vector.load %arg4[%c48, %c0_22] : memref<201x384xf32, #tpu.memory_space<vmem>>, vector<8x384xf32>
    tpu.vector_store %arg4[%c48, %c0_22], %21 {strides = array<i32>} : memref<201x384xf32, #tpu.memory_space<vmem>>, vector<8x384xf32>,
    %c0_23 = arith.constant 0 : index
    %c0_24 = arith.constant 0 : index
    %c22 = arith.constant 22 : index
    %23 = vector.load %arg1[%c0_23, %c0_24, %c22] : memref<1x8x480xf32, #tpu.memory_space<vmem>>, vector<1x8x384xf32>
    %24 = vector.shape_cast %23 : vector<1x8x384xf32> to vector<8x384xf32>
    %c56 = arith.constant 56 : index
    %c0_25 = arith.constant 0 : index
    %25 = vector.load %arg4[%c56, %c0_25] : memref<201x384xf32, #tpu.memory_space<vmem>>, vector<8x384xf32>
    tpu.vector_store %arg4[%c56, %c0_25], %24 {strides = array<i32>} : memref<201x384xf32, #tpu.memory_space<vmem>>, vector<8x384xf32>,
    %c0_26 = arith.constant 0 : index
    %c0_27 = arith.constant 0 : index
    %c23 = arith.constant 23 : index
    %26 = vector.load %arg1[%c0_26, %c0_27, %c23] : memref<1x8x480xf32, #tpu.memory_space<vmem>>, vector<1x8x384xf32>
    %27 = vector.shape_cast %26 : vector<1x8x384xf32> to vector<8x384xf32>
    %c64 = arith.constant 64 : index
    %c0_28 = arith.constant 0 : index
    %28 = vector.load %arg4[%c64, %c0_28] : memref<201x384xf32, #tpu.memory_space<vmem>>, vector<8x384xf32>
    tpu.vector_store %arg4[%c64, %c0_28], %27 {strides = array<i32>} : memref<201x384xf32, #tpu.memory_space<vmem>>, vector<8x384xf32>,
    %c0_29 = arith.constant 0 : index
    %c0_30 = arith.constant 0 : index
    %c24_31 = arith.constant 24 : index
    %29 = vector.load %arg1[%c0_29, %c0_30, %c24_31] : memref<1x8x480xf32, #tpu.memory_space<vmem>>, vector<1x8x384xf32>
    %30 = vector.shape_cast %29 : vector<1x8x384xf32> to vector<8x384xf32>
    %c72 = arith.constant 72 : index
    %c0_32 = arith.constant 0 : index
    %31 = vector.load %arg4[%c72, %c0_32] : memref<201x384xf32, #tpu.memory_space<vmem>>, vector<8x384xf32>
    tpu.vector_store %arg4[%c72, %c0_32], %30 {strides = array<i32>} : memref<201x384xf32, #tpu.memory_space<vmem>>, vector<8x384xf32>,
    %c0_33 = arith.constant 0 : index
    %c0_34 = arith.constant 0 : index
    %c40_35 = arith.constant 40 : index
    %32 = vector.load %arg1[%c0_33, %c0_34, %c40_35] : memref<1x8x480xf32, #tpu.memory_space<vmem>>, vector<1x8x384xf32>
    %33 = vector.shape_cast %32 : vector<1x8x384xf32> to vector<8x384xf32>
    %c80 = arith.constant 80 : index
    %c0_36 = arith.constant 0 : index
    %34 = vector.load %arg4[%c80, %c0_36] : memref<201x384xf32, #tpu.memory_space<vmem>>, vector<8x384xf32>
    tpu.vector_store %arg4[%c80, %c0_36], %33 {strides = array<i32>} : memref<201x384xf32, #tpu.memory_space<vmem>>, vector<8x384xf32>,
    %c0_37 = arith.constant 0 : index
    %c0_38 = arith.constant 0 : index
    %c41 = arith.constant 41 : index
    %35 = vector.load %arg1[%c0_37, %c0_38, %c41] : memref<1x8x480xf32, #tpu.memory_space<vmem>>, vector<1x8x384xf32>
    %36 = vector.shape_cast %35 : vector<1x8x384xf32> to vector<8x384xf32>
    %c88 = arith.constant 88 : index
    %c0_39 = arith.constant 0 : index
    %37 = vector.load %arg4[%c88, %c0_39] : memref<201x384xf32, #tpu.memory_space<vmem>>, vector<8x384xf32>
    tpu.vector_store %arg4[%c88, %c0_39], %36 {strides = array<i32>} : memref<201x384xf32, #tpu.memory_space<vmem>>, vector<8x384xf32>,
    %c0_40 = arith.constant 0 : index
    %c0_41 = arith.constant 0 : index
    %c42 = arith.constant 42 : index
    %38 = vector.load %arg1[%c0_40, %c0_41, %c42] : memref<1x8x480xf32, #tpu.memory_space<vmem>>, vector<1x8x384xf32>
    %39 = vector.shape_cast %38 : vector<1x8x384xf32> to vector<8x384xf32>
    %c96 = arith.constant 96 : index
    %c0_42 = arith.constant 0 : index
    %40 = vector.load %arg4[%c96, %c0_42] : memref<201x384xf32, #tpu.memory_space<vmem>>, vector<8x384xf32>
    tpu.vector_store %arg4[%c96, %c0_42], %39 {strides = array<i32>} : memref<201x384xf32, #tpu.memory_space<vmem>>, vector<8x384xf32>,
    %c0_43 = arith.constant 0 : index
    %c0_44 = arith.constant 0 : index
    %c43 = arith.constant 43 : index
    %41 = vector.load %arg1[%c0_43, %c0_44, %c43] : memref<1x8x480xf32, #tpu.memory_space<vmem>>, vector<1x8x384xf32>
    %42 = vector.shape_cast %41 : vector<1x8x384xf32> to vector<8x384xf32>
    %c104 = arith.constant 104 : index
    %c0_45 = arith.constant 0 : index
    %43 = vector.load %arg4[%c104, %c0_45] : memref<201x384xf32, #tpu.memory_space<vmem>>, vector<8x384xf32>
    tpu.vector_store %arg4[%c104, %c0_45], %42 {strides = array<i32>} : memref<201x384xf32, #tpu.memory_space<vmem>>, vector<8x384xf32>,
    %c0_46 = arith.constant 0 : index
    %c0_47 = arith.constant 0 : index
    %c44 = arith.constant 44 : index
    %44 = vector.load %arg1[%c0_46, %c0_47, %c44] : memref<1x8x480xf32, #tpu.memory_space<vmem>>, vector<1x8x384xf32>
    %45 = vector.shape_cast %44 : vector<1x8x384xf32> to vector<8x384xf32>
    %c112 = arith.constant 112 : index
    %c0_48 = arith.constant 0 : index
    %46 = vector.load %arg4[%c112, %c0_48] : memref<201x384xf32, #tpu.memory_space<vmem>>, vector<8x384xf32>
    tpu.vector_store %arg4[%c112, %c0_48], %45 {strides = array<i32>} : memref<201x384xf32, #tpu.memory_space<vmem>>, vector<8x384xf32>,
    %c0_49 = arith.constant 0 : index
    %c0_50 = arith.constant 0 : index
    %c60 = arith.constant 60 : index
    %47 = vector.load %arg1[%c0_49, %c0_50, %c60] : memref<1x8x480xf32, #tpu.memory_space<vmem>>, vector<1x8x384xf32>
    %48 = vector.shape_cast %47 : vector<1x8x384xf32> to vector<8x384xf32>
    %c120 = arith.constant 120 : index
    %c0_51 = arith.constant 0 : index
    %49 = vector.load %arg4[%c120, %c0_51] : memref<201x384xf32, #tpu.memory_space<vmem>>, vector<8x384xf32>
    tpu.vector_store %arg4[%c120, %c0_51], %48 {strides = array<i32>} : memref<201x384xf32, #tpu.memory_space<vmem>>, vector<8x384xf32>,
    %c0_52 = arith.constant 0 : index
    %c0_53 = arith.constant 0 : index
    %c61 = arith.constant 61 : index
    %50 = vector.load %arg1[%c0_52, %c0_53, %c61] : memref<1x8x480xf32, #tpu.memory_space<vmem>>, vector<1x8x384xf32>
    %51 = vector.shape_cast %50 : vector<1x8x384xf32> to vector<8x384xf32>
    %c128 = arith.constant 128 : index
    %c0_54 = arith.constant 0 : index
    %52 = vector.load %arg4[%c128, %c0_54] : memref<201x384xf32, #tpu.memory_space<vmem>>, vector<8x384xf32>
    tpu.vector_store %arg4[%c128, %c0_54], %51 {strides = array<i32>} : memref<201x384xf32, #tpu.memory_space<vmem>>, vector<8x384xf32>,
    %c0_55 = arith.constant 0 : index
    %c0_56 = arith.constant 0 : index
    %c62 = arith.constant 62 : index
    %53 = vector.load %arg1[%c0_55, %c0_56, %c62] : memref<1x8x480xf32, #tpu.memory_space<vmem>>, vector<1x8x384xf32>
    %54 = vector.shape_cast %53 : vector<1x8x384xf32> to vector<8x384xf32>
    %c136 = arith.constant 136 : index
    %c0_57 = arith.constant 0 : index
    %55 = vector.load %arg4[%c136, %c0_57] : memref<201x384xf32, #tpu.memory_space<vmem>>, vector<8x384xf32>
    tpu.vector_store %arg4[%c136, %c0_57], %54 {strides = array<i32>} : memref<201x384xf32, #tpu.memory_space<vmem>>, vector<8x384xf32>,
    %c0_58 = arith.constant 0 : index
    %c0_59 = arith.constant 0 : index
    %c63 = arith.constant 63 : index
    %56 = vector.load %arg1[%c0_58, %c0_59, %c63] : memref<1x8x480xf32, #tpu.memory_space<vmem>>, vector<1x8x384xf32>
    %57 = vector.shape_cast %56 : vector<1x8x384xf32> to vector<8x384xf32>
    %c144 = arith.constant 144 : index
    %c0_60 = arith.constant 0 : index
    %58 = vector.load %arg4[%c144, %c0_60] : memref<201x384xf32, #tpu.memory_space<vmem>>, vector<8x384xf32>
    tpu.vector_store %arg4[%c144, %c0_60], %57 {strides = array<i32>} : memref<201x384xf32, #tpu.memory_space<vmem>>, vector<8x384xf32>,
    %c0_61 = arith.constant 0 : index
    %c0_62 = arith.constant 0 : index
    %c64_63 = arith.constant 64 : index
    %59 = vector.load %arg1[%c0_61, %c0_62, %c64_63] : memref<1x8x480xf32, #tpu.memory_space<vmem>>, vector<1x8x384xf32>
    %60 = vector.shape_cast %59 : vector<1x8x384xf32> to vector<8x384xf32>
    %c152 = arith.constant 152 : index
    %c0_64 = arith.constant 0 : index
    %61 = vector.load %arg4[%c152, %c0_64] : memref<201x384xf32, #tpu.memory_space<vmem>>, vector<8x384xf32>
    tpu.vector_store %arg4[%c152, %c0_64], %60 {strides = array<i32>} : memref<201x384xf32, #tpu.memory_space<vmem>>, vector<8x384xf32>,
    %c0_65 = arith.constant 0 : index
    %c0_66 = arith.constant 0 : index
    %c80_67 = arith.constant 80 : index
    %62 = vector.load %arg1[%c0_65, %c0_66, %c80_67] : memref<1x8x480xf32, #tpu.memory_space<vmem>>, vector<1x8x384xf32>
    %63 = vector.shape_cast %62 : vector<1x8x384xf32> to vector<8x384xf32>
    %c160 = arith.constant 160 : index
    %c0_68 = arith.constant 0 : index
    %64 = vector.load %arg4[%c160, %c0_68] : memref<201x384xf32, #tpu.memory_space<vmem>>, vector<8x384xf32>
    tpu.vector_store %arg4[%c160, %c0_68], %63 {strides = array<i32>} : memref<201x384xf32, #tpu.memory_space<vmem>>, vector<8x384xf32>,
    %c0_69 = arith.constant 0 : index
    %c0_70 = arith.constant 0 : index
    %c81 = arith.constant 81 : index
    %65 = vector.load %arg1[%c0_69, %c0_70, %c81] : memref<1x8x480xf32, #tpu.memory_space<vmem>>, vector<1x8x384xf32>
    %66 = vector.shape_cast %65 : vector<1x8x384xf32> to vector<8x384xf32>
    %c168 = arith.constant 168 : index
    %c0_71 = arith.constant 0 : index
    %67 = vector.load %arg4[%c168, %c0_71] : memref<201x384xf32, #tpu.memory_space<vmem>>, vector<8x384xf32>
    tpu.vector_store %arg4[%c168, %c0_71], %66 {strides = array<i32>} : memref<201x384xf32, #tpu.memory_space<vmem>>, vector<8x384xf32>,
    %c0_72 = arith.constant 0 : index
    %c0_73 = arith.constant 0 : index
    %c82 = arith.constant 82 : index
    %68 = vector.load %arg1[%c0_72, %c0_73, %c82] : memref<1x8x480xf32, #tpu.memory_space<vmem>>, vector<1x8x384xf32>
    %69 = vector.shape_cast %68 : vector<1x8x384xf32> to vector<8x384xf32>
    %c176 = arith.constant 176 : index
    %c0_74 = arith.constant 0 : index
    %70 = vector.load %arg4[%c176, %c0_74] : memref<201x384xf32, #tpu.memory_space<vmem>>, vector<8x384xf32>
    tpu.vector_store %arg4[%c176, %c0_74], %69 {strides = array<i32>} : memref<201x384xf32, #tpu.memory_space<vmem>>, vector<8x384xf32>,
    %c0_75 = arith.constant 0 : index
    %c0_76 = arith.constant 0 : index
    %c83 = arith.constant 83 : index
    %71 = vector.load %arg1[%c0_75, %c0_76, %c83] : memref<1x8x480xf32, #tpu.memory_space<vmem>>, vector<1x8x384xf32>
    %72 = vector.shape_cast %71 : vector<1x8x384xf32> to vector<8x384xf32>
    %c184 = arith.constant 184 : index
    %c0_77 = arith.constant 0 : index
    %73 = vector.load %arg4[%c184, %c0_77] : memref<201x384xf32, #tpu.memory_space<vmem>>, vector<8x384xf32>
    tpu.vector_store %arg4[%c184, %c0_77], %72 {strides = array<i32>} : memref<201x384xf32, #tpu.memory_space<vmem>>, vector<8x384xf32>,
    %c0_78 = arith.constant 0 : index
    %c0_79 = arith.constant 0 : index
    %c84 = arith.constant 84 : index
    %74 = vector.load %arg1[%c0_78, %c0_79, %c84] : memref<1x8x480xf32, #tpu.memory_space<vmem>>, vector<1x8x384xf32>
    %75 = vector.shape_cast %74 : vector<1x8x384xf32> to vector<8x384xf32>
    %c192 = arith.constant 192 : index
    %c0_80 = arith.constant 0 : index
    %76 = vector.load %arg4[%c192, %c0_80] : memref<201x384xf32, #tpu.memory_space<vmem>>, vector<8x384xf32>
    tpu.vector_store %arg4[%c192, %c0_80], %75 {strides = array<i32>} : memref<201x384xf32, #tpu.memory_space<vmem>>, vector<8x384xf32>,
    %c0_81 = arith.constant 0 : index
    %c0_82 = arith.constant 0 : index
    %77 = vector.load %arg2[%c0_81, %c0_82] : memref<16x201xf32, #tpu.memory_space<vmem>>, vector<16x201xf32>
    %c0_83 = arith.constant 0 : index
    %c0_84 = arith.constant 0 : index
    %78 = vector.load %arg4[%c0_83, %c0_84] : memref<201x384xf32, #tpu.memory_space<vmem>>, vector<201x384xf32>
    %cst_85 = arith.constant dense<0.000000e+00> : vector<16x384xf32>
    %79 = tpu.matmul %77, %78, %cst_85 {dimension_numbers = #tpu.dot_dimension_numbers<[1], [0], [0], [1], [0, 0, 1, 1], [], []>} : vector<16x201xf32>, vector<201x384xf32>, vector<16x384xf32> -> vector<16x384xf32>
    %c0_86 = arith.constant 0 : index
    %c0_87 = arith.constant 0 : index
    %c0_88 = arith.constant 0 : index
    %80 = vector.load %arg3[%c0_86, %c0_87, %c0_88] : memref<1x16x384xf32, #tpu.memory_space<vmem>>, vector<1x16x384xf32>
    %81 = vector.shape_cast %80 : vector<1x16x384xf32> to vector<16x384xf32>
    %82 = vector.shape_cast %79 : vector<16x384xf32> to vector<1x16x384xf32>
    tpu.vector_store %arg3[%c0_86, %c0_87, %c0_88], %82 {strides = array<i32>} : memref<1x16x384xf32, #tpu.memory_space<vmem>>, vector<1x16x384xf32>,
    return
  }
  func.func @transform_0(%arg0: i32) -> (i32, i32, i32) {
    %c0_i32 = arith.constant 0 : i32
    %c0_i32_0 = arith.constant 0 : i32
    %c0_i32_1 = arith.constant 0 : i32
    return %arg0, %c0_i32, %c0_i32_0 : i32, i32, i32
  }
  func.func @transform_1(%arg0: i32) -> (i32, i32) {
    %c0_i32 = arith.constant 0 : i32
    %c0_i32_0 = arith.constant 0 : i32
    %c0_i32_1 = arith.constant 0 : i32
    return %c0_i32, %c0_i32_0 : i32, i32
  }
  func.func @transform_2(%arg0: i32) -> (i32, i32, i32) {
    %c0_i32 = arith.constant 0 : i32
    %c0_i32_0 = arith.constant 0 : i32
    %c0_i32_1 = arith.constant 0 : i32
    return %arg0, %c0_i32, %c0_i32_0 : i32, i32, i32
  }
}

</mosaic_0001>

<llo_original>
// kernel: tpu_custom_call.1
$region0: #{tpu_custom_call.1}
  #allocation0 [shape = 'u32[]', space=smem, size = 0x4, offset = 0x4, fixed_abs, tag = 'smem constant byte address 0x4 - core index']
  #allocation1 [shape = 'u32[144,128]{1,0:T(1,128)}', space=vmem, size = 0x12000, scoped, tag = 'internal scratch']
  #allocation2 [shape = 'f32[201,384]{1,0:T(8,128)}', space=vmem, size = 0x4e000, scoped, tag = 'scratch operand']
  %s0 = inlined_call_operand.hbm [shape: f32[2,8,480], index: 0, kind: input, shape index: {}]
  %s1 = inlined_call_operand.hbm [shape: f32[16,201], index: 1, kind: input, shape index: {}]
  %s2 = inlined_call_operand.hbm [shape: f32[2,16,384], index: 2, kind: output, shape index: {}]
  %s3 = sld [smem:[#allocation0]]
  $region49: #{tpu_custom_call.1} parent=0
    _
  %s5 = ssub.s32 1, %s3
  %s6 = scalar_select 0, %s5, %s3
  $region1: #{tpu_custom_call.1} parent=0
    #allocation3 [shape = 'u8[32768]{0}', space=vmem, size = 0x8000, scoped, tag = 'input window, operand 0']
    #allocation4 [shape = 's32[2]{0}', space=sflag, size = 0x8, scoped, tag = 'scoped memory for tpu_custom_call.1']
    #allocation5 [shape = 's32[2]{0}', space=sflag, size = 0x8, scoped, tag = 'scoped memory for tpu_custom_call.1']
    #allocation6 [shape = 'u8[16384]{0}', space=vmem, size = 0x4000, scoped, tag = 'input window, operand 1, single buffered']
    #allocation7 [shape = 's32[1]{0}', space=sflag, size = 0x4, scoped, tag = 'scoped memory for tpu_custom_call.1']
    #allocation8 [shape = 'u8[49152]{0}', space=vmem, size = 0xc000, scoped, tag = 'output window, operand 0']
    %7 = vsyncpa [#allocation4], 0
    %s8 = scalar_lea.sflag [#allocation4], 1
    %9 = vsyncpa %s8, 0
    %10 = vsyncpa [#allocation7], 0
    %11 = vsyncpa [#allocation5], 0
    %s12 = scalar_lea.sflag [#allocation5], 1
    %13 = vsyncpa %s12, 0
    loop: start=0, step=1, limit=4
    $region2: #{tpu_custom_call.1} parent=1 // loop_pre_header
      _
    $region3: #{tpu_custom_call.1} parent=1 // loop_header
      %s15 = sphi 0, %s19
      %p16 = scmp.ge.s32.totalorder %s15, 4
      %s25 = sphi 0, %s27
      %s28 = sphi 0, %s25
      %s29 = sphi 0, %s28
      %s45 = sphi 0, %s29
      %s49 = sphi 0, %s49
      %s51 = sphi 0, %s49
      %s52 = sphi 0, %s51
      %s66 = sphi 0, %s52
      %s72 = sphi 0, %s74
      %s75 = sphi 0, %s72
      %s76 = sphi 0, %s75
      %s92 = sphi 0, %s76
    $region4: #{tpu_custom_call.1} parent=1 // loop_header_branch
      %18 = sbr.rel (%p16) target = $region8
    $region5: #{tpu_custom_call.1} parent=1 // loop_body
      %s20 = ssub.s32 %s15, 1
      %s21 = ssub.s32 %s15, 2
      %s22 = sadd.s32 %s15, 1
      %s23 = ssub.s32 %s15, %s22
      %p24 = scmp.eq.s32.totalorder %s23, 0
      %s26 = sadd.s32 %s25, 1
      %s27 = scalar_select %p24, %s25, %s26
      %p30 = pneg %p24
      %p31 = scmp.eq.s32.totalorder %s15, 1
      %p32 = por %p30, %p31
      %p33 = scmp.ne.s32.totalorder %s25, %s28
      %p34 = scmp.eq.s32.totalorder %s15, 0
      %p35 = por %p33, %p34
      %p36 = scmp.ne.s32.totalorder %s25, %s28
      %p37 = scmp.eq.s32.totalorder %s20, 1
      %p38 = por %p36, %p37
      %p39 = scmp.ne.s32.totalorder %s28, %s29
      %p40 = scmp.eq.s32.totalorder %s20, 0
      %p41 = por %p39, %p40
      %p42 = scmp.ne.s32.totalorder %s28, %s29
      %p43 = scmp.eq.s32.totalorder %s21, 1
      %p44 = por %p42, %p43
      %p46 = scmp.ne.s32.totalorder %s29, %s45
      %p47 = scmp.eq.s32.totalorder %s21, 0
      %p48 = por %p46, %p47
      %s50 = sadd.s32 %s49, 1
      %p53 = scmp.eq.s32.totalorder %s15, 1
      %p54 = scmp.ne.s32.totalorder %s49, %s51
      %p55 = scmp.eq.s32.totalorder %s15, 0
      %p56 = por %p54, %p55
      %p57 = scmp.ne.s32.totalorder %s49, %s51
      %p58 = scmp.eq.s32.totalorder %s20, 1
      %p59 = por %p57, %p58
      %p60 = scmp.ne.s32.totalorder %s51, %s52
      %p61 = scmp.eq.s32.totalorder %s20, 0
      %p62 = por %p60, %p61
      %p63 = scmp.ne.s32.totalorder %s51, %s52
      %p64 = scmp.eq.s32.totalorder %s21, 1
      %p65 = por %p63, %p64
      %p67 = scmp.ne.s32.totalorder %s52, %s66
      %p68 = scmp.eq.s32.totalorder %s21, 0
      %p69 = por %p67, %p68
      %s70 = ssub.s32 %s15, %s22
      %p71 = scmp.eq.s32.totalorder %s70, 0
      %s73 = sadd.s32 %s72, 1
      %s74 = scalar_select %p71, %s72, %s73
      %p77 = pneg %p71
      %p78 = scmp.eq.s32.totalorder %s15, 1
      %p79 = por %p77, %p78
      %p80 = scmp.ne.s32.totalorder %s72, %s75
      %p81 = scmp.eq.s32.totalorder %s15, 0
      %p82 = por %p80, %p81
      %p83 = scmp.ne.s32.totalorder %s72, %s75
      %p84 = scmp.eq.s32.totalorder %s20, 1
      %p85 = por %p83, %p84
      %p86 = scmp.ne.s32.totalorder %s75, %s76
      %p87 = scmp.eq.s32.totalorder %s20, 0
      %p88 = por %p86, %p87
      %p89 = scmp.ne.s32.totalorder %s75, %s76
      %p90 = scmp.eq.s32.totalorder %s21, 1
      %p91 = por %p89, %p90
      %p93 = scmp.ne.s32.totalorder %s76, %s92
      %p94 = scmp.eq.s32.totalorder %s21, 0
      %p95 = por %p93, %p94
      %p96 = scmp.le.s32.totalorder 1, %s15
      %p97 = scmp.lt.s32.totalorder %s15, 3
      %p98 = pnand %p96, %p97
      %p99 = pneg %p98
      // Predicated region
      $region9: #{tpu_custom_call.1} parent=5 // pred_check
        _
      $region10: #{tpu_custom_call.1} parent=5 // pred_check_branch
        %101 = sbr.rel (%p98) target = $region12
      $region11: #{tpu_custom_call.1} parent=5 // pred_region
        %s102 = ssub.s32 %s15, 1
        // Predicated region
        $region13: #{tpu_custom_call.1} parent=11 // pred_check
          %p103 = pneg %p62
        $region14: #{tpu_custom_call.1} parent=11 // pred_check_branch
          %105 = sbr.rel (%p103) target = $region16
        $region15: #{tpu_custom_call.1} parent=11 // pred_region
          %s107 = ssub.s32 512, 512
          %108 = vsyncadd [#allocation7], %s107
          %s109 = sshll.u32 [#allocation6], 4
          %s110 = int_to_ptr.vmem [resolvable:$true] %s109
          %115 = dma.hbm_to_vmem [thread:$0]  %s1, 512, %s110, [#allocation7], 256, 256, 16
        $region16: #{tpu_custom_call.1} parent=11 // pred_fallthru
          _
      $region12: #{tpu_custom_call.1} parent=5 // pred_fallthru
        _
      %p116 = scmp.lt.s32.totalorder %s15, 2
      // Predicated region
      $region17: #{tpu_custom_call.1} parent=5 // pred_check
        %p117 = pneg %p116
      $region18: #{tpu_custom_call.1} parent=5 // pred_check_branch
        %119 = sbr.rel (%p117) target = $region20
      $region19: #{tpu_custom_call.1} parent=5 // pred_region
        // Predicated region
        $region21: #{tpu_custom_call.1} parent=19 // pred_check
          %p120 = pneg %p35
        $region22: #{tpu_custom_call.1} parent=19 // pred_check_branch
          %122 = sbr.rel (%p120) target = $region24
        $region23: #{tpu_custom_call.1} parent=19 // pred_region
          %s123 = sand.u32 %s25, 1
          %s124 = scalar_lea.sflag [#allocation4], %s123
          %s125 = sand.u32 %s25, 1
          %s126 = smul.addr %s125, 32
          %s127 = scalar_lea.vmem [#allocation3], %s126
          %s129 = ssub.s32 512, 512
          %130 = vsyncadd %s124, %s129
          %s131 = smul.addr %s15, 4
          %s132 = smul.addr %s131, 128
          %s133 = scalar_lea.hbm %s0, %s132
          %s135 = sshll.u32 %s127, 4
          %s136 = int_to_ptr.vmem [resolvable:$true] %s135
          %138 = dma.hbm_to_vmem [thread:$0]  %s133, 512, %s136, %s124
        $region24: #{tpu_custom_call.1} parent=19 // pred_fallthru
          _
      $region20: #{tpu_custom_call.1} parent=5 // pred_fallthru
        _
      %p139 = scmp.le.s32.totalorder 1, %s15
      %p140 = scmp.lt.s32.totalorder %s15, 3
      %p141 = pnand %p139, %p140
      %p142 = pneg %p141
      // Predicated region
      $region25: #{tpu_custom_call.1} parent=5 // pred_check
        _
      $region26: #{tpu_custom_call.1} parent=5 // pred_check_branch
        %144 = sbr.rel (%p141) target = $region28
      $region27: #{tpu_custom_call.1} parent=5 // pred_region
        %s145 = ssub.s32 %s15, 1
        %s146 = sand.u32 %s28, 1
        %s147 = scalar_lea.sflag [#allocation4], %s146
        %s148 = sand.u32 %s28, 1
        %s149 = smul.addr %s148, 32
        %s150 = scalar_lea.vmem [#allocation3], %s149
        // Predicated region
        $region29: #{tpu_custom_call.1} parent=27 // pred_check
          %p151 = pneg %p41
        $region30: #{tpu_custom_call.1} parent=27 // pred_check_branch
          %153 = sbr.rel (%p151) target = $region32
        $region31: #{tpu_custom_call.1} parent=27 // pred_region
          %154 = dma.done %s147, 512
        $region32: #{tpu_custom_call.1} parent=27 // pred_fallthru
          _
        // Predicated region
        $region33: #{tpu_custom_call.1} parent=27 // pred_check
          %p155 = pneg %p62
        $region34: #{tpu_custom_call.1} parent=27 // pred_check_branch
          %157 = sbr.rel (%p155) target = $region36
        $region35: #{tpu_custom_call.1} parent=27 // pred_region
          %158 = dma.done [#allocation7], 512
        $region36: #{tpu_custom_call.1} parent=27 // pred_fallthru
          _
        %s159 = sand.u32 %s28, 1
        %s160 = scalar_lea.sflag [#allocation4], %s159
        %s161 = sand.u32 %s28, 1
        %s162 = smul.addr %s161, 32
        %s163 = scalar_lea.vmem [#allocation3], %s162
        %p164 = pneg %p41
        %p165 = pneg %p38
        %p166 = pneg %p62
        %p167 = pneg %p59
        %p168 = pneg %p88
        %p169 = pneg %p85
        %s170 = sand.u32 %s75, 1
        %s171 = scalar_lea.sflag [#allocation5], %s170
        %s172 = sand.u32 %s75, 1
        %s173 = smul.addr %s172, 48
        %s174 = scalar_lea.vmem [#allocation8], %s173
        %v175 = vlaneseq
        %vm176 = vcmp.ge.s32.totalorder %v175, 0
        %vm177 = vcmp.lt.s32.totalorder %v175, 384
        %vm178 = vmand %vm176, %vm177
        %s179 = scalar_lea.vmem [#allocation2], 600
        %180 = vst.msk [vmem:[%s179] ss:$8 sm:$0x7] %vm178, 1.0
        %181 = vst.msk [vmem:[%s179] ss:$8 sm:$0x0] %vm178, 1.0
        %v182 = vld [vmem:[%s150] sm:$0xff]
        %v183 = vld [vmem:[%s150 + $0x8] sm:$0xff]
        %v184 = vld [vmem:[%s150 + $0x10] sm:$0xff]
        %185 = vst [vmem:[#allocation2] sm:$0xff] %v182
        %186 = vst [vmem:[#allocation2 + $0x8] sm:$0xff] %v183
        %187 = vst [vmem:[#allocation2 + $0x10] sm:$0xff] %v184
        %v188 = vld [vmem:[%s150] sm:$0xff]
        %v189 = vld [vmem:[%s150 + $0x8] sm:$0xff]
        %v190 = vld [vmem:[%s150 + $0x10] sm:$0xff]
        %v191 = vld [vmem:[%s150 + $0x18] sm:$0xff]
        %196 = vrot.lane.b32.xlu0 %v188, 127
        %v197 = vpop.permute.xlu0 %196
        %198 = vrot.lane.b32.xlu0 %v189, 127
        %v199 = vpop.permute.xlu0 %198
        %200 = vrot.lane.b32.xlu0 %v190, 127
        %v201 = vpop.permute.xlu0 %200
        %202 = vrot.lane.b32.xlu0 %v191, 127
        %v203 = vpop.permute.xlu0 %202
        %vm204 = vcmask 1039360
        %v205 = vsel %vm204, %v197, %v199
        %v206 = vsel %vm204, %v199, %v201
        %v207 = vsel %vm204, %v201, %v203
        %211 = vst [vmem:[#allocation2 + $0x18] sm:$0xff] %v205
        %212 = vst [vmem:[#allocation2 + $0x20] sm:$0xff] %v206
        %213 = vst [vmem:[#allocation2 + $0x28] sm:$0xff] %v207
        %v214 = vld [vmem:[%s150] sm:$0xff]
        %v215 = vld [vmem:[%s150 + $0x8] sm:$0xff]
        %v216 = vld [vmem:[%s150 + $0x10] sm:$0xff]
        %v217 = vld [vmem:[%s150 + $0x18] sm:$0xff]
        %222 = vrot.lane.b32.xlu0 %v214, 126
        %v223 = vpop.permute.xlu0 %222
        %224 = vrot.lane.b32.xlu0 %v215, 126
        %v225 = vpop.permute.xlu0 %224
        %226 = vrot.lane.b32.xlu0 %v216, 126
        %v227 = vpop.permute.xlu0 %226
        %228 = vrot.lane.b32.xlu0 %v217, 126
        %v229 = vpop.permute.xlu0 %228
        %vm230 = vcmask 1031168
        %v231 = vsel %vm230, %v223, %v225
        %v232 = vsel %vm230, %v225, %v227
        %v233 = vsel %vm230, %v227, %v229
        %237 = vst [vmem:[#allocation2 + $0x30] sm:$0xff] %v231
        %238 = vst [vmem:[#allocation2 + $0x38] sm:$0xff] %v232
        %239 = vst [vmem:[#allocation2 + $0x40] sm:$0xff] %v233
        %v240 = vld [vmem:[%s150] sm:$0xff]
        %v241 = vld [vmem:[%s150 + $0x8] sm:$0xff]
        %v242 = vld [vmem:[%s150 + $0x10] sm:$0xff]
        %v243 = vld [vmem:[%s150 + $0x18] sm:$0xff]
        %248 = vrot.lane.b32.xlu0 %v240, 125
        %v249 = vpop.permute.xlu0 %248
        %250 = vrot.lane.b32.xlu0 %v241, 125
        %v251 = vpop.permute.xlu0 %250
        %252 = vrot.lane.b32.xlu0 %v242, 125
        %v253 = vpop.permute.xlu0 %252
        %254 = vrot.lane.b32.xlu0 %v243, 125
        %v255 = vpop.permute.xlu0 %254
        %vm256 = vcmask 1022976
        %v257 = vsel %vm256, %v249, %v251
        %v258 = vsel %vm256, %v251, %v253
        %v259 = vsel %vm256, %v253, %v255
        %263 = vst [vmem:[#allocation2 + $0x48] sm:$0xff] %v257
        %264 = vst [vmem:[#allocation2 + $0x50] sm:$0xff] %v258
        %265 = vst [vmem:[#allocation2 + $0x58] sm:$0xff] %v259
        %v266 = vld [vmem:[%s150] sm:$0xff]
        %v267 = vld [vmem:[%s150 + $0x8] sm:$0xff]
        %v268 = vld [vmem:[%s150 + $0x10] sm:$0xff]
        %v269 = vld [vmem:[%s150 + $0x18] sm:$0xff]
        %274 = vrot.lane.b32.xlu0 %v266, 124
        %v275 = vpop.permute.xlu0 %274
        %276 = vrot.lane.b32.xlu0 %v267, 124
        %v277 = vpop.permute.xlu0 %276
        %278 = vrot.lane.b32.xlu0 %v268, 124
        %v279 = vpop.permute.xlu0 %278
        %280 = vrot.lane.b32.xlu0 %v269, 124
        %v281 = vpop.permute.xlu0 %280
        %vm282 = vcmask 1014784
        %v283 = vsel %vm282, %v275, %v277
        %v284 = vsel %vm282, %v277, %v279
        %v285 = vsel %vm282, %v279, %v281
        %289 = vst [vmem:[#allocation2 + $0x60] sm:$0xff] %v283
        %290 = vst [vmem:[#allocation2 + $0x68] sm:$0xff] %v284
        %291 = vst [vmem:[#allocation2 + $0x70] sm:$0xff] %v285
        %v292 = vld [vmem:[%s150] sm:$0xff]
        %v293 = vld [vmem:[%s150 + $0x8] sm:$0xff]
        %v294 = vld [vmem:[%s150 + $0x10] sm:$0xff]
        %v295 = vld [vmem:[%s150 + $0x18] sm:$0xff]
        %300 = vrot.lane.b32.xlu0 %v292, 108
        %v301 = vpop.permute.xlu0 %300
        %302 = vrot.lane.b32.xlu0 %v293, 108
        %v303 = vpop.permute.xlu0 %302
        %304 = vrot.lane.b32.xlu0 %v294, 108
        %v305 = vpop.permute.xlu0 %304
        %306 = vrot.lane.b32.xlu0 %v295, 108
        %v307 = vpop.permute.xlu0 %306
        %vm308 = vcmask 883712
        %v309 = vsel %vm308, %v301, %v303
        %v310 = vsel %vm308, %v303, %v305
        %v311 = vsel %vm308, %v305, %v307
        %315 = vst [vmem:[#allocation2 + $0x78] sm:$0xff] %v309
        %316 = vst [vmem:[#allocation2 + $0x80] sm:$0xff] %v310
        %317 = vst [vmem:[#allocation2 + $0x88] sm:$0xff] %v311
        %v318 = vld [vmem:[%s150] sm:$0xff]
        %v319 = vld [vmem:[%s150 + $0x8] sm:$0xff]
        %v320 = vld [vmem:[%s150 + $0x10] sm:$0xff]
        %v321 = vld [vmem:[%s150 + $0x18] sm:$0xff]
        %326 = vrot.lane.b32.xlu0 %v318, 107
        %v327 = vpop.permute.xlu0 %326
        %328 = vrot.lane.b32.xlu0 %v319, 107
        %v329 = vpop.permute.xlu0 %328
        %330 = vrot.lane.b32.xlu0 %v320, 107
        %v331 = vpop.permute.xlu0 %330
        %332 = vrot.lane.b32.xlu0 %v321, 107
        %v333 = vpop.permute.xlu0 %332
        %vm334 = vcmask 875520
        %v335 = vsel %vm334, %v327, %v329
        %v336 = vsel %vm334, %v329, %v331
        %v337 = vsel %vm334, %v331, %v333
        %341 = vst [vmem:[#allocation2 + $0x90] sm:$0xff] %v335
        %342 = vst [vmem:[#allocation2 + $0x98] sm:$0xff] %v336
        %343 = vst [vmem:[#allocation2 + $0xa0] sm:$0xff] %v337
        %v344 = vld [vmem:[%s150] sm:$0xff]
        %v345 = vld [vmem:[%s150 + $0x8] sm:$0xff]
        %v346 = vld [vmem:[%s150 + $0x10] sm:$0xff]
        %v347 = vld [vmem:[%s150 + $0x18] sm:$0xff]
        %352 = vrot.lane.b32.xlu0 %v344, 106
        %v353 = vpop.permute.xlu0 %352
        %354 = vrot.lane.b32.xlu0 %v345, 106
        %v355 = vpop.permute.xlu0 %354
        %356 = vrot.lane.b32.xlu0 %v346, 106
        %v357 = vpop.permute.xlu0 %356
        %358 = vrot.lane.b32.xlu0 %v347, 106
        %v359 = vpop.permute.xlu0 %358
        %vm360 = vcmask 867328
        %v361 = vsel %vm360, %v353, %v355
        %v362 = vsel %vm360, %v355, %v357
        %v363 = vsel %vm360, %v357, %v359
        %367 = vst [vmem:[#allocation2 + $0xa8] sm:$0xff] %v361
        %368 = vst [vmem:[#allocation2 + $0xb0] sm:$0xff] %v362
        %369 = vst [vmem:[#allocation2 + $0xb8] sm:$0xff] %v363
        %v370 = vld [vmem:[%s150] sm:$0xff]
        %v371 = vld [vmem:[%s150 + $0x8] sm:$0xff]
        %v372 = vld [vmem:[%s150 + $0x10] sm:$0xff]
        %v373 = vld [vmem:[%s150 + $0x18] sm:$0xff]
        %378 = vrot.lane.b32.xlu0 %v370, 105
        %v379 = vpop.permute.xlu0 %378
        %380 = vrot.lane.b32.xlu0 %v371, 105
        %v381 = vpop.permute.xlu0 %380
        %382 = vrot.lane.b32.xlu0 %v372, 105
        %v383 = vpop.permute.xlu0 %382
        %384 = vrot.lane.b32.xlu0 %v373, 105
        %v385 = vpop.permute.xlu0 %384
        %vm386 = vcmask 859136
        %v387 = vsel %vm386, %v379, %v381
        %v388 = vsel %vm386, %v381, %v383
        %v389 = vsel %vm386, %v383, %v385
        %393 = vst [vmem:[#allocation2 + $0xc0] sm:$0xff] %v387
        %394 = vst [vmem:[#allocation2 + $0xc8] sm:$0xff] %v388
        %395 = vst [vmem:[#allocation2 + $0xd0] sm:$0xff] %v389
        %v396 = vld [vmem:[%s150] sm:$0xff]
        %v397 = vld [vmem:[%s150 + $0x8] sm:$0xff]
        %v398 = vld [vmem:[%s150 + $0x10] sm:$0xff]
        %v399 = vld [vmem:[%s150 + $0x18] sm:$0xff]
        %404 = vrot.lane.b32.xlu0 %v396, 104
        %v405 = vpop.permute.xlu0 %404
        %406 = vrot.lane.b32.xlu0 %v397, 104
        %v407 = vpop.permute.xlu0 %406
        %408 = vrot.lane.b32.xlu0 %v398, 104
        %v409 = vpop.permute.xlu0 %408
        %410 = vrot.lane.b32.xlu0 %v399, 104
        %v411 = vpop.permute.xlu0 %410
        %vm412 = vcmask 850944
        %v413 = vsel %vm412, %v405, %v407
        %v414 = vsel %vm412, %v407, %v409
        %v415 = vsel %vm412, %v409, %v411
        %419 = vst [vmem:[#allocation2 + $0xd8] sm:$0xff] %v413
        %420 = vst [vmem:[#allocation2 + $0xe0] sm:$0xff] %v414
        %421 = vst [vmem:[#allocation2 + $0xe8] sm:$0xff] %v415
        %v422 = vld [vmem:[%s150] sm:$0xff]
        %v423 = vld [vmem:[%s150 + $0x8] sm:$0xff]
        %v424 = vld [vmem:[%s150 + $0x10] sm:$0xff]
        %v425 = vld [vmem:[%s150 + $0x18] sm:$0xff]
        %430 = vrot.lane.b32.xlu0 %v422, 88
        %v431 = vpop.permute.xlu0 %430
        %432 = vrot.lane.b32.xlu0 %v423, 88
        %v433 = vpop.permute.xlu0 %432
        %434 = vrot.lane.b32.xlu0 %v424, 88
        %v435 = vpop.permute.xlu0 %434
        %436 = vrot.lane.b32.xlu0 %v425, 88
        %v437 = vpop.permute.xlu0 %436
        %vm438 = vcmask 719872
        %v439 = vsel %vm438, %v431, %v433
        %v440 = vsel %vm438, %v433, %v435
        %v441 = vsel %vm438, %v435, %v437
        %445 = vst [vmem:[#allocation2 + $0xf0] sm:$0xff] %v439
        %446 = vst [vmem:[#allocation2 + $0xf8] sm:$0xff] %v440
        %447 = vst [vmem:[#allocation2 + $0x100] sm:$0xff] %v441
        %v448 = vld [vmem:[%s150] sm:$0xff]
        %v449 = vld [vmem:[%s150 + $0x8] sm:$0xff]
        %v450 = vld [vmem:[%s150 + $0x10] sm:$0xff]
        %v451 = vld [vmem:[%s150 + $0x18] sm:$0xff]
        %456 = vrot.lane.b32.xlu0 %v448, 87
        %v457 = vpop.permute.xlu0 %456
        %458 = vrot.lane.b32.xlu0 %v449, 87
        %v459 = vpop.permute.xlu0 %458
        %460 = vrot.lane.b32.xlu0 %v450, 87
        %v461 = vpop.permute.xlu0 %460
        %462 = vrot.lane.b32.xlu0 %v451, 87
        %v463 = vpop.permute.xlu0 %462
        %vm464 = vcmask 711680
        %v465 = vsel %vm464, %v457, %v459
        %v466 = vsel %vm464, %v459, %v461
        %v467 = vsel %vm464, %v461, %v463
        %471 = vst [vmem:[#allocation2 + $0x108] sm:$0xff] %v465
        %472 = vst [vmem:[#allocation2 + $0x110] sm:$0xff] %v466
        %473 = vst [vmem:[#allocation2 + $0x118] sm:$0xff] %v467
        %v474 = vld [vmem:[%s150] sm:$0xff]
        %v475 = vld [vmem:[%s150 + $0x8] sm:$0xff]
        %v476 = vld [vmem:[%s150 + $0x10] sm:$0xff]
        %v477 = vld [vmem:[%s150 + $0x18] sm:$0xff]
        %482 = vrot.lane.b32.xlu0 %v474, 86
        %v483 = vpop.permute.xlu0 %482
        %484 = vrot.lane.b32.xlu0 %v475, 86
        %v485 = vpop.permute.xlu0 %484
        %486 = vrot.lane.b32.xlu0 %v476, 86
        %v487 = vpop.permute.xlu0 %486
        %488 = vrot.lane.b32.xlu0 %v477, 86
        %v489 = vpop.permute.xlu0 %488
        %vm490 = vcmask 703488
        %v491 = vsel %vm490, %v483, %v485
        %v492 = vsel %vm490, %v485, %v487
        %v493 = vsel %vm490, %v487, %v489
        %497 = vst [vmem:[#allocation2 + $0x120] sm:$0xff] %v491
        %498 = vst [vmem:[#allocation2 + $0x128] sm:$0xff] %v492
        %499 = vst [vmem:[#allocation2 + $0x130] sm:$0xff] %v493
        %v500 = vld [vmem:[%s150] sm:$0xff]
        %v501 = vld [vmem:[%s150 + $0x8] sm:$0xff]
        %v502 = vld [vmem:[%s150 + $0x10] sm:$0xff]
        %v503 = vld [vmem:[%s150 + $0x18] sm:$0xff]
        %508 = vrot.lane.b32.xlu0 %v500, 85
        %v509 = vpop.permute.xlu0 %508
        %510 = vrot.lane.b32.xlu0 %v501, 85
        %v511 = vpop.permute.xlu0 %510
        %512 = vrot.lane.b32.xlu0 %v502, 85
        %v513 = vpop.permute.xlu0 %512
        %514 = vrot.lane.b32.xlu0 %v503, 85
        %v515 = vpop.permute.xlu0 %514
        %vm516 = vcmask 695296
        %v517 = vsel %vm516, %v509, %v511
        %v518 = vsel %vm516, %v511, %v513
        %v519 = vsel %vm516, %v513, %v515
        %523 = vst [vmem:[#allocation2 + $0x138] sm:$0xff] %v517
        %524 = vst [vmem:[#allocation2 + $0x140] sm:$0xff] %v518
        %525 = vst [vmem:[#allocation2 + $0x148] sm:$0xff] %v519
        %v526 = vld [vmem:[%s150] sm:$0xff]
        %v527 = vld [vmem:[%s150 + $0x8] sm:$0xff]
        %v528 = vld [vmem:[%s150 + $0x10] sm:$0xff]
        %v529 = vld [vmem:[%s150 + $0x18] sm:$0xff]
        %534 = vrot.lane.b32.xlu0 %v526, 84
        %v535 = vpop.permute.xlu0 %534
        %536 = vrot.lane.b32.xlu0 %v527, 84
        %v537 = vpop.permute.xlu0 %536
        %538 = vrot.lane.b32.xlu0 %v528, 84
        %v539 = vpop.permute.xlu0 %538
        %540 = vrot.lane.b32.xlu0 %v529, 84
        %v541 = vpop.permute.xlu0 %540
        %vm542 = vcmask 687104
        %v543 = vsel %vm542, %v535, %v537
        %v544 = vsel %vm542, %v537, %v539
        %v545 = vsel %vm542, %v539, %v541
        %549 = vst [vmem:[#allocation2 + $0x150] sm:$0xff] %v543
        %550 = vst [vmem:[#allocation2 + $0x158] sm:$0xff] %v544
        %551 = vst [vmem:[#allocation2 + $0x160] sm:$0xff] %v545
        %v552 = vld [vmem:[%s150] sm:$0xff]
        %v553 = vld [vmem:[%s150 + $0x8] sm:$0xff]
        %v554 = vld [vmem:[%s150 + $0x10] sm:$0xff]
        %v555 = vld [vmem:[%s150 + $0x18] sm:$0xff]
        %560 = vrot.lane.b32.xlu0 %v552, 68
        %v561 = vpop.permute.xlu0 %560
        %562 = vrot.lane.b32.xlu0 %v553, 68
        %v563 = vpop.permute.xlu0 %562
        %564 = vrot.lane.b32.xlu0 %v554, 68
        %v565 = vpop.permute.xlu0 %564
        %566 = vrot.lane.b32.xlu0 %v555, 68
        %v567 = vpop.permute.xlu0 %566
        %vm568 = vcmask 556032
        %v569 = vsel %vm568, %v561, %v563
        %v570 = vsel %vm568, %v563, %v565
        %v571 = vsel %vm568, %v565, %v567
        %575 = vst [vmem:[#allocation2 + $0x168] sm:$0xff] %v569
        %576 = vst [vmem:[#allocation2 + $0x170] sm:$0xff] %v570
        %577 = vst [vmem:[#allocation2 + $0x178] sm:$0xff] %v571
        %v578 = vld [vmem:[%s150] sm:$0xff]
        %v579 = vld [vmem:[%s150 + $0x8] sm:$0xff]
        %v580 = vld [vmem:[%s150 + $0x10] sm:$0xff]
        %v581 = vld [vmem:[%s150 + $0x18] sm:$0xff]
        %586 = vrot.lane.b32.xlu0 %v578, 67
        %v587 = vpop.permute.xlu0 %586
        %588 = vrot.lane.b32.xlu0 %v579, 67
        %v589 = vpop.permute.xlu0 %588
        %590 = vrot.lane.b32.xlu0 %v580, 67
        %v591 = vpop.permute.xlu0 %590
        %592 = vrot.lane.b32.xlu0 %v581, 67
        %v593 = vpop.permute.xlu0 %592
        %vm594 = vcmask 547840
        %v595 = vsel %vm594, %v587, %v589
        %v596 = vsel %vm594, %v589, %v591
        %v597 = vsel %vm594, %v591, %v593
        %601 = vst [vmem:[#allocation2 + $0x180] sm:$0xff] %v595
        %602 = vst [vmem:[#allocation2 + $0x188] sm:$0xff] %v596
        %603 = vst [vmem:[#allocation2 + $0x190] sm:$0xff] %v597
        %v604 = vld [vmem:[%s150] sm:$0xff]
        %v605 = vld [vmem:[%s150 + $0x8] sm:$0xff]
        %v606 = vld [vmem:[%s150 + $0x10] sm:$0xff]
        %v607 = vld [vmem:[%s150 + $0x18] sm:$0xff]
        %612 = vrot.lane.b32.xlu0 %v604, 66
        %v613 = vpop.permute.xlu0 %612
        %614 = vrot.lane.b32.xlu0 %v605, 66
        %v615 = vpop.permute.xlu0 %614
        %616 = vrot.lane.b32.xlu0 %v606, 66
        %v617 = vpop.permute.xlu0 %616
        %618 = vrot.lane.b32.xlu0 %v607, 66
        %v619 = vpop.permute.xlu0 %618
        %vm620 = vcmask 539648
        %v621 = vsel %vm620, %v613, %v615
        %v622 = vsel %vm620, %v615, %v617
        %v623 = vsel %vm620, %v617, %v619
        %627 = vst [vmem:[#allocation2 + $0x198] sm:$0xff] %v621
        %628 = vst [vmem:[#allocation2 + $0x1a0] sm:$0xff] %v622
        %629 = vst [vmem:[#allocation2 + $0x1a8] sm:$0xff] %v623
        %v630 = vld [vmem:[%s150] sm:$0xff]
        %v631 = vld [vmem:[%s150 + $0x8] sm:$0xff]
        %v632 = vld [vmem:[%s150 + $0x10] sm:$0xff]
        %v633 = vld [vmem:[%s150 + $0x18] sm:$0xff]
        %638 = vrot.lane.b32.xlu0 %v630, 65
        %v639 = vpop.permute.xlu0 %638
        %640 = vrot.lane.b32.xlu0 %v631, 65
        %v641 = vpop.permute.xlu0 %640
        %642 = vrot.lane.b32.xlu0 %v632, 65
        %v643 = vpop.permute.xlu0 %642
        %644 = vrot.lane.b32.xlu0 %v633, 65
        %v645 = vpop.permute.xlu0 %644
        %vm646 = vcmask 531456
        %v647 = vsel %vm646, %v639, %v641
        %v648 = vsel %vm646, %v641, %v643
        %v649 = vsel %vm646, %v643, %v645
        %653 = vst [vmem:[#allocation2 + $0x1b0] sm:$0xff] %v647
        %654 = vst [vmem:[#allocation2 + $0x1b8] sm:$0xff] %v648
        %655 = vst [vmem:[#allocation2 + $0x1c0] sm:$0xff] %v649
        %v656 = vld [vmem:[%s150] sm:$0xff]
        %v657 = vld [vmem:[%s150 + $0x8] sm:$0xff]
        %v658 = vld [vmem:[%s150 + $0x10] sm:$0xff]
        %v659 = vld [vmem:[%s150 + $0x18] sm:$0xff]
        %664 = vrot.lane.b32.xlu0 %v656, 64
        %v665 = vpop.permute.xlu0 %664
        %666 = vrot.lane.b32.xlu0 %v657, 64
        %v667 = vpop.permute.xlu0 %666
        %668 = vrot.lane.b32.xlu0 %v658, 64
        %v669 = vpop.permute.xlu0 %668
        %670 = vrot.lane.b32.xlu0 %v659, 64
        %v671 = vpop.permute.xlu0 %670
        %vm672 = vcmask 523264
        %v673 = vsel %vm672, %v665, %v667
        %v674 = vsel %vm672, %v667, %v669
        %v675 = vsel %vm672, %v669, %v671
        %679 = vst [vmem:[#allocation2 + $0x1c8] sm:$0xff] %v673
        %680 = vst [vmem:[#allocation2 + $0x1d0] sm:$0xff] %v674
        %681 = vst [vmem:[#allocation2 + $0x1d8] sm:$0xff] %v675
        %v682 = vld [vmem:[%s150] sm:$0xff]
        %v683 = vld [vmem:[%s150 + $0x8] sm:$0xff]
        %v684 = vld [vmem:[%s150 + $0x10] sm:$0xff]
        %v685 = vld [vmem:[%s150 + $0x18] sm:$0xff]
        %690 = vrot.lane.b32.xlu0 %v682, 48
        %v691 = vpop.permute.xlu0 %690
        %692 = vrot.lane.b32.xlu0 %v683, 48
        %v693 = vpop.permute.xlu0 %692
        %694 = vrot.lane.b32.xlu0 %v684, 48
        %v695 = vpop.permute.xlu0 %694
        %696 = vrot.lane.b32.xlu0 %v685, 48
        %v697 = vpop.permute.xlu0 %696
        %vm698 = vcmask 392192
        %v699 = vsel %vm698, %v691, %v693
        %v700 = vsel %vm698, %v693, %v695
        %v701 = vsel %vm698, %v695, %v697
        %705 = vst [vmem:[#allocation2 + $0x1e0] sm:$0xff] %v699
        %706 = vst [vmem:[#allocation2 + $0x1e8] sm:$0xff] %v700
        %707 = vst [vmem:[#allocation2 + $0x1f0] sm:$0xff] %v701
        %v708 = vld [vmem:[%s150] sm:$0xff]
        %v709 = vld [vmem:[%s150 + $0x8] sm:$0xff]
        %v710 = vld [vmem:[%s150 + $0x10] sm:$0xff]
        %v711 = vld [vmem:[%s150 + $0x18] sm:$0xff]
        %716 = vrot.lane.b32.xlu0 %v708, 47
        %v717 = vpop.permute.xlu0 %716
        %718 = vrot.lane.b32.xlu0 %v709, 47
        %v719 = vpop.permute.xlu0 %718
        %720 = vrot.lane.b32.xlu0 %v710, 47
        %v721 = vpop.permute.xlu0 %720
        %722 = vrot.lane.b32.xlu0 %v711, 47
        %v723 = vpop.permute.xlu0 %722
        %vm724 = vcmask 384000
        %v725 = vsel %vm724, %v717, %v719
        %v726 = vsel %vm724, %v719, %v721
        %v727 = vsel %vm724, %v721, %v723
        %731 = vst [vmem:[#allocation2 + $0x1f8] sm:$0xff] %v725
        %732 = vst [vmem:[#allocation2 + $0x200] sm:$0xff] %v726
        %733 = vst [vmem:[#allocation2 + $0x208] sm:$0xff] %v727
        %v734 = vld [vmem:[%s150] sm:$0xff]
        %v735 = vld [vmem:[%s150 + $0x8] sm:$0xff]
        %v736 = vld [vmem:[%s150 + $0x10] sm:$0xff]
        %v737 = vld [vmem:[%s150 + $0x18] sm:$0xff]
        %742 = vrot.lane.b32.xlu0 %v734, 46
        %v743 = vpop.permute.xlu0 %742
        %744 = vrot.lane.b32.xlu0 %v735, 46
        %v745 = vpop.permute.xlu0 %744
        %746 = vrot.lane.b32.xlu0 %v736, 46
        %v747 = vpop.permute.xlu0 %746
        %748 = vrot.lane.b32.xlu0 %v737, 46
        %v749 = vpop.permute.xlu0 %748
        %vm750 = vcmask 375808
        %v751 = vsel %vm750, %v743, %v745
        %v752 = vsel %vm750, %v745, %v747
        %v753 = vsel %vm750, %v747, %v749
        %757 = vst [vmem:[#allocation2 + $0x210] sm:$0xff] %v751
        %758 = vst [vmem:[#allocation2 + $0x218] sm:$0xff] %v752
        %759 = vst [vmem:[#allocation2 + $0x220] sm:$0xff] %v753
        %v760 = vld [vmem:[%s150] sm:$0xff]
        %v761 = vld [vmem:[%s150 + $0x8] sm:$0xff]
        %v762 = vld [vmem:[%s150 + $0x10] sm:$0xff]
        %v763 = vld [vmem:[%s150 + $0x18] sm:$0xff]
        %768 = vrot.lane.b32.xlu0 %v760, 45
        %v769 = vpop.permute.xlu0 %768
        %770 = vrot.lane.b32.xlu0 %v761, 45
        %v771 = vpop.permute.xlu0 %770
        %772 = vrot.lane.b32.xlu0 %v762, 45
        %v773 = vpop.permute.xlu0 %772
        %774 = vrot.lane.b32.xlu0 %v763, 45
        %v775 = vpop.permute.xlu0 %774
        %vm776 = vcmask 367616
        %v777 = vsel %vm776, %v769, %v771
        %v778 = vsel %vm776, %v771, %v773
        %v779 = vsel %vm776, %v773, %v775
        %783 = vst [vmem:[#allocation2 + $0x228] sm:$0xff] %v777
        %784 = vst [vmem:[#allocation2 + $0x230] sm:$0xff] %v778
        %785 = vst [vmem:[#allocation2 + $0x238] sm:$0xff] %v779
        %v786 = vld [vmem:[%s150] sm:$0xff]
        %v787 = vld [vmem:[%s150 + $0x8] sm:$0xff]
        %v788 = vld [vmem:[%s150 + $0x10] sm:$0xff]
        %v789 = vld [vmem:[%s150 + $0x18] sm:$0xff]
        %794 = vrot.lane.b32.xlu0 %v786, 44
        %v795 = vpop.permute.xlu0 %794
        %796 = vrot.lane.b32.xlu0 %v787, 44
        %v797 = vpop.permute.xlu0 %796
        %798 = vrot.lane.b32.xlu0 %v788, 44
        %v799 = vpop.permute.xlu0 %798
        %800 = vrot.lane.b32.xlu0 %v789, 44
        %v801 = vpop.permute.xlu0 %800
        %vm802 = vcmask 359424
        %v803 = vsel %vm802, %v795, %v797
        %v804 = vsel %vm802, %v797, %v799
        %v805 = vsel %vm802, %v799, %v801
        %809 = vst [vmem:[#allocation2 + $0x240] sm:$0xff] %v803
        %810 = vst [vmem:[#allocation2 + $0x248] sm:$0xff] %v804
        %811 = vst [vmem:[#allocation2 + $0x250] sm:$0xff] %v805
        %v812 = vld [vmem:[#allocation6] sm:$0xff]
        %v813 = vld [vmem:[#allocation6 + $0x8] sm:$0xff]
        %v814 = vld [vmem:[#allocation6 + $0x10] sm:$0xff]
        %v815 = vld [vmem:[#allocation6 + $0x18] sm:$0xff]
        %v816 = vld [vmem:[#allocation2] sm:$0xff]
        %v817 = vld [vmem:[#allocation2 + $0x8] sm:$0xff]
        %v818 = vld [vmem:[#allocation2 + $0x10] sm:$0xff]
        %v819 = vld [vmem:[#allocation2 + $0x18] sm:$0xff]
        %v820 = vld [vmem:[#allocation2 + $0x20] sm:$0xff]
        %v821 = vld [vmem:[#allocation2 + $0x28] sm:$0xff]
        %v822 = vld [vmem:[#allocation2 + $0x30] sm:$0xff]
        %v823 = vld [vmem:[#allocation2 + $0x38] sm:$0xff]
        %v824 = vld [vmem:[#allocation2 + $0x40] sm:$0xff]
        %v825 = vld [vmem:[#allocation2 + $0x48] sm:$0xff]
        %v826 = vld [vmem:[#allocation2 + $0x50] sm:$0xff]
        %v827 = vld [vmem:[#allocation2 + $0x58] sm:$0xff]
        %v828 = vld [vmem:[#allocation2 + $0x60] sm:$0xff]
        %v829 = vld [vmem:[#allocation2 + $0x68] sm:$0xff]
        %v830 = vld [vmem:[#allocation2 + $0x70] sm:$0xff]
        %v831 = vld [vmem:[#allocation2 + $0x78] sm:$0xff]
        %v832 = vld [vmem:[#allocation2 + $0x80] sm:$0xff]
        %v833 = vld [vmem:[#allocation2 + $0x88] sm:$0xff]
        %v834 = vld [vmem:[#allocation2 + $0x90] sm:$0xff]
        %v835 = vld [vmem:[#allocation2 + $0x98] sm:$0xff]
        %v836 = vld [vmem:[#allocation2 + $0xa0] sm:$0xff]
        %v837 = vld [vmem:[#allocation2 + $0xa8] sm:$0xff]
        %v838 = vld [vmem:[#allocation2 + $0xb0] sm:$0xff]
        %v839 = vld [vmem:[#allocation2 + $0xb8] sm:$0xff]
        %v840 = vld [vmem:[#allocation2 + $0xc0] sm:$0xff]
        %v841 = vld [vmem:[#allocation2 + $0xc8] sm:$0xff]
        %v842 = vld [vmem:[#allocation2 + $0xd0] sm:$0xff]
        %v843 = vld [vmem:[#allocation2 + $0xd8] sm:$0xff]
        %v844 = vld [vmem:[#allocation2 + $0xe0] sm:$0xff]
        %v845 = vld [vmem:[#allocation2 + $0xe8] sm:$0xff]
        %v846 = vld [vmem:[#allocation2 + $0xf0] sm:$0xff]
        %v847 = vld [vmem:[#allocation2 + $0xf8] sm:$0xff]
        %v848 = vld [vmem:[#allocation2 + $0x100] sm:$0xff]
        %v849 = vld [vmem:[#allocation2 + $0x108] sm:$0xff]
        %v850 = vld [vmem:[#allocation2 + $0x110] sm:$0xff]
        %v851 = vld [vmem:[#allocation2 + $0x118] sm:$0xff]
        %v852 = vld [vmem:[#allocation2 + $0x120] sm:$0xff]
        %v853 = vld [vmem:[#allocation2 + $0x128] sm:$0xff]
        %v854 = vld [vmem:[#allocation2 + $0x130] sm:$0xff]
        %v855 = vld [vmem:[#allocation2 + $0x138] sm:$0xff]
        %v856 = vld [vmem:[#allocation2 + $0x140] sm:$0xff]
        %v857 = vld [vmem:[#allocation2 + $0x148] sm:$0xff]
        %v858 = vld [vmem:[#allocation2 + $0x150] sm:$0xff]
        %v859 = vld [vmem:[#allocation2 + $0x158] sm:$0xff]
        %v860 = vld [vmem:[#allocation2 + $0x160] sm:$0xff]
        %v861 = vld [vmem:[#allocation2 + $0x168] sm:$0xff]
        %v862 = vld [vmem:[#allocation2 + $0x170] sm:$0xff]
        %v863 = vld [vmem:[#allocation2 + $0x178] sm:$0xff]
        %v864 = vld [vmem:[#allocation2 + $0x180] sm:$0xff]
        %v865 = vld [vmem:[#allocation2 + $0x188] sm:$0xff]
        %v866 = vld [vmem:[#allocation2 + $0x190] sm:$0xff]
        %v867 = vld [vmem:[#allocation2 + $0x198] sm:$0xff]
        %v868 = vld [vmem:[#allocation2 + $0x1a0] sm:$0xff]
        %v869 = vld [vmem:[#allocation2 + $0x1a8] sm:$0xff]
        %v870 = vld [vmem:[#allocation2 + $0x1b0] sm:$0xff]
        %v871 = vld [vmem:[#allocation2 + $0x1b8] sm:$0xff]
        %v872 = vld [vmem:[#allocation2 + $0x1c0] sm:$0xff]
        %v873 = vld [vmem:[#allocation2 + $0x1c8] sm:$0xff]
        %v874 = vld [vmem:[#allocation2 + $0x1d0] sm:$0xff]
        %v875 = vld [vmem:[#allocation2 + $0x1d8] sm:$0xff]
        %v876 = vld [vmem:[#allocation2 + $0x1e0] sm:$0xff]
        %v877 = vld [vmem:[#allocation2 + $0x1e8] sm:$0xff]
        %v878 = vld [vmem:[#allocation2 + $0x1f0] sm:$0xff]
        %v879 = vld [vmem:[#allocation2 + $0x1f8] sm:$0xff]
        %v880 = vld [vmem:[#allocation2 + $0x200] sm:$0xff]
        %v881 = vld [vmem:[#allocation2 + $0x208] sm:$0xff]
        %v882 = vld [vmem:[#allocation2 + $0x210] sm:$0xff]
        %v883 = vld [vmem:[#allocation2 + $0x218] sm:$0xff]
        %v884 = vld [vmem:[#allocation2 + $0x220] sm:$0xff]
        %v885 = vld [vmem:[#allocation2 + $0x228] sm:$0xff]
        %v886 = vld [vmem:[#allocation2 + $0x230] sm:$0xff]
        %v887 = vld [vmem:[#allocation2 + $0x238] sm:$0xff]
        %v888 = vld [vmem:[#allocation2 + $0x240] sm:$0xff]
        %v889 = vld [vmem:[#allocation2 + $0x248] sm:$0xff]
        %v890 = vld [vmem:[#allocation2 + $0x250] sm:$0xff]
        %v891 = vld [vmem:[#allocation2 + $0x258] sm:$0x1]
        %v892 = vld [vmem:[#allocation2 + $0x260] sm:$0x1]
        %v893 = vld [vmem:[#allocation2 + $0x268] sm:$0x1]
        %vm894 = vcmask 596992
        %v896 = vsel %vm894, %v813, 0
        %v899 = vsel %vm894, %v815, 0
        %vm901 = vcmask 1040384
        %v903 = vsel %vm901, %v891, 0
        %v906 = vsel %vm901, %v892, 0
        %v909 = vsel %vm901, %v893, 0
        %911 = vmatprep.subr.mxu0 %v862
        %912 = vmatpush1.msra.mxu0 %v861
        %913 = vmatprep.subr.mxu0 %v859
        %914 = vmatpush1.msra.mxu0 %v858
        %915 = vmatprep.subr.mxu0 %v856
        %916 = vmatpush1.msra.mxu0 %v855
        %917 = vmatprep.subr.mxu0 %v853
        %918 = vmatpush1.msra.mxu0 %v852
        %919 = vmatprep.subr.mxu0 %v850
        %920 = vmatpush1.msra.mxu0 %v849
        %921 = vmatprep.subr.mxu0 %v847
        %922 = vmatpush1.msra.mxu0 %v846
        %923 = vmatprep.subr.mxu0 %v844
        %924 = vmatpush1.msra.mxu0 %v843
        %925 = vmatprep.subr.mxu0 %v841
        %926 = vmatpush1.msra.mxu0 %v840
        %927 = vmatprep.subr.mxu0 %v838
        %928 = vmatpush1.msra.mxu0 %v837
        %929 = vmatprep.subr.mxu0 %v835
        %930 = vmatpush1.msra.mxu0 %v834
        %931 = vmatprep.subr.mxu0 %v832
        %932 = vmatpush1.msra.mxu0 %v831
        %933 = vmatprep.subr.mxu0 %v829
        %934 = vmatpush1.msra.mxu0 %v828
        %935 = vmatprep.subr.mxu0 %v826
        %936 = vmatpush1.msra.mxu0 %v825
        %937 = vmatprep.subr.mxu0 %v823
        %938 = vmatpush1.msra.mxu0 %v822
        %939 = vmatprep.subr.mxu0 %v820
        %940 = vmatpush1.msra.mxu0 %v819
        %941 = vmatprep.subr.mxu0 %v817
        %942 = vmatpush1.msra.mxu0 %v816
        %943 = vmatprep.subr.mxu0 0.0
        %944 = vmatpush2.msra.mxu0 0.0
        %945 = vmatprep.subr.mxu0 0.0
        %946 = vmatpush2.msra.mxu0 0.0
        %947 = vmatprep.subr.mxu0 0.0
        %948 = vmatpush2.msra.mxu0 0.0
        %949 = vmatprep.subr.mxu0 0.0
        %950 = vmatpush2.msra.mxu0 0.0
        %951 = vmatprep.subr.mxu0 0.0
        %952 = vmatpush2.msra.mxu0 0.0
        %953 = vmatprep.subr.mxu0 0.0
        %954 = vmatpush2.msra.mxu0 0.0
        %955 = vmatprep.subr.mxu0 %v906
        %956 = vmatpush2.msra.mxu0 %v903
        %957 = vmatprep.subr.mxu0 %v889
        %958 = vmatpush2.msra.mxu0 %v888
        %959 = vmatprep.subr.mxu0 %v886
        %960 = vmatpush2.msra.mxu0 %v885
        %961 = vmatprep.subr.mxu0 %v883
        %962 = vmatpush2.msra.mxu0 %v882
        %963 = vmatprep.subr.mxu0 %v880
        %964 = vmatpush2.msra.mxu0 %v879
        %965 = vmatprep.subr.mxu0 %v877
        %966 = vmatpush2.msra.mxu0 %v876
        %967 = vmatprep.subr.mxu0 %v874
        %968 = vmatpush2.msra.mxu0 %v873
        %969 = vmatprep.subr.mxu0 %v871
        %970 = vmatpush2.msra.mxu0 %v870
        %971 = vmatprep.subr.mxu0 %v868
        %972 = vmatpush2.msra.mxu0 %v867
        %973 = vmatprep.subr.mxu0 %v865
        %974 = vmatpush2.msra.mxu0 %v864
        %975 = vmatprep.mubr.f32.mxu0 %v896
        %976 = vmatmul.mubr.f32.gmra.mxu0 %v812
        %v977 = vpop.f32.mrf.mxu0
        %v978 = vadd.f32 0.0, %v977
        %v979 = vpop.f32.mrf.mxu0
        %v980 = vadd.f32 0.0, %v979
        %981 = vmatprep.mubr.f32.mxu0 %v899
        %982 = vmatmul.mubr.f32.gmra.mxu0 %v814
        %v983 = vpop.f32.mrf.mxu0
        %v984 = vadd.f32 0.0, %v983
        %v985 = vpop.f32.mrf.mxu0
        %v986 = vadd.f32 0.0, %v985
        %987 = vdwg.mxu0
        %988 = vmatprep.subr.mxu0 0.0
        %989 = vmatpush1.msra.mxu0 %v863
        %990 = vmatprep.subr.mxu0 0.0
        %991 = vmatpush1.msra.mxu0 %v860
        %992 = vmatprep.subr.mxu0 0.0
        %993 = vmatpush1.msra.mxu0 %v857
        %994 = vmatprep.subr.mxu0 0.0
        %995 = vmatpush1.msra.mxu0 %v854
        %996 = vmatprep.subr.mxu0 0.0
        %997 = vmatpush1.msra.mxu0 %v851
        %998 = vmatprep.subr.mxu0 0.0
        %999 = vmatpush1.msra.mxu0 %v848
        %1000 = vmatprep.subr.mxu0 0.0
        %1001 = vmatpush1.msra.mxu0 %v845
        %1002 = vmatprep.subr.mxu0 0.0
        %1003 = vmatpush1.msra.mxu0 %v842
        %1004 = vmatprep.subr.mxu0 0.0
        %1005 = vmatpush1.msra.mxu0 %v839
        %1006 = vmatprep.subr.mxu0 0.0
        %1007 = vmatpush1.msra.mxu0 %v836
        %1008 = vmatprep.subr.mxu0 0.0
        %1009 = vmatpush1.msra.mxu0 %v833
        %1010 = vmatprep.subr.mxu0 0.0
        %1011 = vmatpush1.msra.mxu0 %v830
        %1012 = vmatprep.subr.mxu0 0.0
        %1013 = vmatpush1.msra.mxu0 %v827
        %1014 = vmatprep.subr.mxu0 0.0
        %1015 = vmatpush1.msra.mxu0 %v824
        %1016 = vmatprep.subr.mxu0 0.0
        %1017 = vmatpush1.msra.mxu0 %v821
        %1018 = vmatprep.subr.mxu0 0.0
        %1019 = vmatpush1.msra.mxu0 %v818
        %1020 = vmatprep.subr.mxu0 0.0
        %1021 = vmatpush2.msra.mxu0 0.0
        %1022 = vmatprep.subr.mxu0 0.0
        %1023 = vmatpush2.msra.mxu0 0.0
        %1024 = vmatprep.subr.mxu0 0.0
        %1025 = vmatpush2.msra.mxu0 0.0
        %1026 = vmatprep.subr.mxu0 0.0
        %1027 = vmatpush2.msra.mxu0 0.0
        %1028 = vmatprep.subr.mxu0 0.0
        %1029 = vmatpush2.msra.mxu0 0.0
        %1030 = vmatprep.subr.mxu0 0.0
        %1031 = vmatpush2.msra.mxu0 0.0
        %1032 = vmatprep.subr.mxu0 0.0
        %1033 = vmatpush2.msra.mxu0 %v909
        %1034 = vmatprep.subr.mxu0 0.0
        %1035 = vmatpush2.msra.mxu0 %v890
        %1036 = vmatprep.subr.mxu0 0.0
        %1037 = vmatpush2.msra.mxu0 %v887
        %1038 = vmatprep.subr.mxu0 0.0
        %1039 = vmatpush2.msra.mxu0 %v884
        %1040 = vmatprep.subr.mxu0 0.0
        %1041 = vmatpush2.msra.mxu0 %v881
        %1042 = vmatprep.subr.mxu0 0.0
        %1043 = vmatpush2.msra.mxu0 %v878
        %1044 = vmatprep.subr.mxu0 0.0
        %1045 = vmatpush2.msra.mxu0 %v875
        %1046 = vmatprep.subr.mxu0 0.0
        %1047 = vmatpush2.msra.mxu0 %v872
        %1048 = vmatprep.subr.mxu0 0.0
        %1049 = vmatpush2.msra.mxu0 %v869
        %1050 = vmatprep.subr.mxu0 0.0
        %1051 = vmatpush2.msra.mxu0 %v866
        %1052 = vmatprep.mubr.f32.mxu0 %v896
        %1053 = vmatmul.mubr.f32.gmra.mxu0 %v812
        %v1054 = vpop.f32.mrf.mxu0
        %v1055 = vadd.f32 0.0, %v1054
        %v1056 = vpop.f32.mrf.mxu0
        %1057 = vmatprep.mubr.f32.mxu0 %v899
        %1058 = vmatmul.mubr.f32.gmra.mxu0 %v814
        %v1059 = vpop.f32.mrf.mxu0
        %v1060 = vadd.f32 0.0, %v1059
        %v1061 = vpop.f32.mrf.mxu0
        %1062 = vdwg.mxu0
        %1063 = vst [vmem:[%s174] sm:$0xff] %v978
        %1064 = vst [vmem:[%s174 + $0x8] sm:$0xff] %v980
        %1065 = vst [vmem:[%s174 + $0x10] sm:$0xff] %v1055
        %1066 = vst [vmem:[%s174 + $0x18] sm:$0xff] %v984
        %1067 = vst [vmem:[%s174 + $0x20] sm:$0xff] %v986
        %1068 = vst [vmem:[%s174 + $0x28] sm:$0xff] %v1060
        %s1069 = sand.u32 %s75, 1
        %s1070 = scalar_lea.sflag [#allocation5], %s1069
        %s1071 = sand.u32 %s75, 1
        %s1072 = smul.addr %s1071, 48
        %s1073 = scalar_lea.vmem [#allocation8], %s1072
        // Predicated region
        $region37: #{tpu_custom_call.1} parent=27 // pred_check
          %p1074 = pneg %p85
        $region38: #{tpu_custom_call.1} parent=27 // pred_check_branch
          %1076 = sbr.rel (%p1074) target = $region40
        $region39: #{tpu_custom_call.1} parent=27 // pred_region
          %s1078 = ssub.s32 768, 768
          %1079 = vsyncadd %s1070, %s1078
          %s1080 = smul.addr %s20, 6
          %s1081 = smul.addr %s1080, 128
          %s1082 = scalar_lea.hbm %s2, %s1081
          %s1083 = sshll.u32 %s1073, 4
          %s1084 = int_to_ptr.vmem [resolvable:$true] %s1083
          %1089 = dma.vmem_to_hbm [thread:$0]  %s1084, 768, %s1082, %s1070, 384, 384, 24
        $region40: #{tpu_custom_call.1} parent=27 // pred_fallthru
          _
      $region28: #{tpu_custom_call.1} parent=5 // pred_fallthru
        _
      %p1090 = scmp.le.s32.totalorder 2, %s15
      // Predicated region
      $region41: #{tpu_custom_call.1} parent=5 // pred_check
        %p1091 = pneg %p1090
      $region42: #{tpu_custom_call.1} parent=5 // pred_check_branch
        %1093 = sbr.rel (%p1091) target = $region44
      $region43: #{tpu_custom_call.1} parent=5 // pred_region
        %s1094 = ssub.s32 %s15, 2
        // Predicated region
        $region45: #{tpu_custom_call.1} parent=43 // pred_check
          %p1095 = pneg %p91
        $region46: #{tpu_custom_call.1} parent=43 // pred_check_branch
          %1097 = sbr.rel (%p1095) target = $region48
        $region47: #{tpu_custom_call.1} parent=43 // pred_region
          %s1098 = sand.u32 %s76, 1
          %s1099 = scalar_lea.sflag [#allocation5], %s1098
          %s1100 = sand.u32 %s76, 1
          %s1101 = smul.addr %s1100, 48
          %s1102 = scalar_lea.vmem [#allocation8], %s1101
          %1103 = dma.done %s1099, 768
        $region48: #{tpu_custom_call.1} parent=43 // pred_fallthru
          _
      $region44: #{tpu_custom_call.1} parent=5 // pred_fallthru
        _
    $region6: #{tpu_custom_call.1} parent=1 // loop_footer
      %s19 = sadd.s32 1, %s15
    $region7: #{tpu_custom_call.1} parent=1 // loop_footer_branch
      %14 = sbr.rel target = $region3
    $region8: #{tpu_custom_call.1} parent=1 // loop_exit
      _
    %1104 = vsyncpa [#allocation4], 1
    %s1105 = scalar_lea.sflag [#allocation4], 1
    %1106 = vsyncpa %s1105, 1
    %1107 = vsyncpa [#allocation7], 1
    %1108 = vsyncpa [#allocation5], 1
    %s1109 = scalar_lea.sflag [#allocation5], 1
    %1110 = vsyncpa %s1109, 1

</llo_original>
